<compile_context>
chip_gen: v6e
topology: v6e:2x2x1
jax: 0.10.0
libtpu: 0.0.40
codegen_flags: <defaults>
</compile_context>

<pallas_src>
import math

import jax
import jax.numpy as jnp
from jax.experimental import pallas as pl
from jax.experimental.pallas import tpu as pltpu


def _round_up(x, m):
    return (x + m - 1) // m * m


def _device_vmem_and_kind():
    """(physical VMEM bytes per TensorCore, lowercase device-kind string)."""
    kind = ""
    try:
        kind = jax.devices()[0].device_kind.lower()
    except Exception:
        pass
    vmem = None
    try:
        vmem = int(pltpu.get_tpu_info().vmem_capacity_bytes)
    except Exception:
        vmem = None
    if not vmem:
        vmem = (64 if "v7" in kind else 128) * 1024 * 1024
    return vmem, kind


def _choose_tiles(M, K, V, out_bytes, tile_budget, prefer_256):
    """Pick (tm, tn): row tile and vocab tile (multiple of 128) fitting VMEM."""
    align = 256 if prefer_256 else 128        # MXU is 2x256^2 on v6e/v7x, 4x128^2 on v5e
    tm = min(align, _round_up(max(M, 1), 8))  # don't blow up tiny batches

    Vp128 = _round_up(V, 128)

    def usage(tn):
        return (2 * tm * K * 2              # x tile (bf16), double-buffered
                + 2 * K * tn * 2            # w tile (bf16), double-buffered
                + 2 * tn * 4                # bias tile (f32), double-buffered
                + 2 * tm * tn * out_bytes   # output tile, double-buffered
                + 4 * tm * 4)               # (tm,1) f32 running max + sum-exp

    if usage(Vp128) <= tile_budget:
        return tm, Vp128                    # whole (128-padded) vocab in one lane-dense tile
    tn = align
    while tn * 2 <= Vp128 and usage(tn * 2) <= tile_budget:
        tn *= 2
    return tm, tn


# ---------------------------------------------------------------------------
# Fused projection + log_softmax kernel (two-pass online logsumexp over vocab)
# ---------------------------------------------------------------------------

def _proj_log_softmax_kernel(x_ref, w_ref, b_ref, o_ref, m_ref, l_ref):
    """One grid step (row_tile i, phase p, vocab_tile j).

    x_ref: [tm, K] bf16 (resident across p, j for a row tile)
    w_ref: [K, tn] bf16, b_ref: [1, tn] f32, o_ref: [tm, tn]
    m_ref / l_ref: [tm, 1] f32 scratch = running row max / sum of exp.

    Phase 0 accumulates logsumexp statistics across vocab tiles; phase 1
    recomputes each logits tile and writes normalized log-probs.  Nothing of
    size [tm, V] is ever materialized in VMEM.
    """
    phase = pl.program_id(1)
    j = pl.program_id(2)

    # bf16 x bf16 -> f32 on the MXU; bias add + softmax math in f32.
    logits = jnp.dot(x_ref[...], w_ref[...],
                     preferred_element_type=jnp.float32) + b_ref[...]

    @pl.when((phase == 0) & (j == 0))
    def _():
        m_ref[...] = jnp.full_like(m_ref, -jnp.inf)
        l_ref[...] = jnp.zeros_like(l_ref)

    @pl.when(phase == 0)
    def _():
        m_prev = m_ref[...]
        m_new = jnp.maximum(m_prev, jnp.max(logits, axis=-1, keepdims=True))
        l_ref[...] = (l_ref[...] * jnp.exp(m_prev - m_new)
                      + jnp.sum(jnp.exp(logits - m_new), axis=-1, keepdims=True))
        m_ref[...] = m_new

    @pl.when(phase == 1)
    def _():
        lse = m_ref[...] + jnp.log(l_ref[...])
        o_ref[...] = (logits - lse).astype(o_ref.dtype)


def proj_log_softmax(x, w, b, *, block_rows=None, block_vocab=None,
                     out_dtype=None):
    """log_softmax(x @ w + b, axis=-1) fused in a single pallas_call.

    x: [..., d_model]; w: [d_model, vocab] (transpose of the PyTorch nn.Linear
    weight), ideally already bf16; b: [vocab].
    """
    orig_shape = x.shape
    K = orig_shape[-1]
    assert w.shape[0] == K, "weight must be [d_model, vocab]"
    V = w.shape[1]
    M = int(math.prod(orig_shape[:-1]))
    out_dtype = x.dtype if out_dtype is None else out_dtype
    out_bytes = jnp.dtype(out_dtype).itemsize

    # Per-generation VMEM budget with headroom (~48 MiB v7x, ~96 MiB v5e/v6e).
    vmem_phys, kind = _device_vmem_and_kind()
    vmem_limit = min(vmem_phys * 3 // 4, 96 * 1024 * 1024)
    tile_budget = int(vmem_limit * 0.8)

    prefer_256 = ("v6" in kind) or ("v7" in kind)
    tm, tn = _choose_tiles(M, K, V, out_bytes, tile_budget, prefer_256)
    if block_rows is not None:
        tm = int(block_rows)
    if block_vocab is not None:
        tn = int(block_vocab)
    assert tm % 8 == 0, "row tile must be a multiple of 8"
    assert tn % 128 == 0, "vocab tile must be a multiple of 128 (lane-dense)"

    Mp = _round_up(M, tm)
    Vp = _round_up(V, tn)

    # bf16 activations/weights feed the MXU; bias stays f32.
    x2 = x.reshape(M, K).astype(jnp.bfloat16)
    if Mp != M:
        x2 = jnp.pad(x2, ((0, Mp - M), (0, 0)))
    w2 = w.astype(jnp.bfloat16)
    b2 = b.reshape(1, V).astype(jnp.float32)
    if Vp != V:
        w2 = jnp.pad(w2, ((0, 0), (0, Vp - V)))
        # Padded vocab columns get a huge negative bias so they never affect
        # the running max / sum-exp; they are sliced off below.
        b2 = jnp.pad(b2, ((0, 0), (0, Vp - V)), constant_values=-1e30)

    grid = (Mp // tm, 2, Vp // tn)   # (row tiles, phase, vocab tiles)

    out = pl.pallas_call(
        _proj_log_softmax_kernel,
        out_shape=jax.ShapeDtypeStruct((Mp, Vp), out_dtype),
        grid_spec=pltpu.PrefetchScalarGridSpec(
            num_scalar_prefetch=0,
            grid=grid,
            in_specs=[
                pl.BlockSpec((tm, K), lambda i, p, j: (i, 0)),   # x: resident per row tile
                pl.BlockSpec((K, tn), lambda i, p, j: (0, j)),   # w: streamed per vocab tile
                pl.BlockSpec((1, tn), lambda i, p, j: (0, j)),   # bias
            ],
            out_specs=pl.BlockSpec((tm, tn), lambda i, p, j: (i, j)),
            scratch_shapes=[
                pltpu.VMEM((tm, 1), jnp.float32),   # running row max
                pltpu.VMEM((tm, 1), jnp.float32),   # running row sum-exp
            ],
        ),
        compiler_params=pltpu.CompilerParams(
            dimension_semantics=("parallel", "arbitrary", "arbitrary"),
            vmem_limit_bytes=int(vmem_limit),
        ),
    )(x2, w2, b2)

    out = out[:M, :V]
    return out.reshape(*orig_shape[:-1], V)


proj_layer_forward = jax.jit(
    proj_log_softmax, static_argnames=("block_rows", "block_vocab", "out_dtype"))


# ---------------------------------------------------------------------------
# Main
# ---------------------------------------------------------------------------

if __name__ == "__main__":
    B, S, d_model, vocab_size = 2, 8, 32, 256

    key = jax.random.PRNGKey(0)
    kx, kw, kb = jax.random.split(key, 3)

    x = jax.random.normal(kx, (B, S, d_model), jnp.float32)
    # PyTorch nn.Linear(d_model, vocab_size) stores weight [vocab, d_model];
    # the kernel consumes the [d_model, vocab] transpose so it computes x@w+b.
    w = 0.02 * jax.random.normal(kw, (d_model, vocab_size), jnp.float32)
    b = 0.02 * jax.random.normal(kb, (vocab_size,), jnp.float32)

    # Parameter prep: projection weight lives in HBM as bf16 (cast ONCE here,
    # never inside the kernel / per grid step).
    w_bf16 = w.astype(jnp.bfloat16)

    ref = jax.nn.log_softmax(x @ w + b, axis=-1)

    # 1) Default tiling (whole vocab fits one lane-dense tile at this size).
    out = jax.block_until_ready(proj_layer_forward(x, w_bf16, b))
    assert out.shape == (B, S, vocab_size)
    err = float(jnp.max(jnp.abs(out - ref)))
    assert err < 5e-2, f"max abs error {err}"
    assert bool(jnp.allclose(jnp.sum(jnp.exp(out), axis=-1), 1.0, atol=1e-3))

    # 2) Force the multi-tile vocab path (online logsumexp across 2 vocab
    #    tiles) to exercise the large-vocab / v7x-friendly code path.
    out2 = jax.block_until_ready(
        proj_layer_forward(x, w_bf16, b, block_vocab=128))
    err2 = float(jnp.max(jnp.abs(out2 - ref)))
    assert err2 < 5e-2, f"max abs error (tiled vocab) {err2}"

    print("KERNEL_OK")
</pallas_src>

<mosaic_0001>
module attributes {stable_mosaic.version = 11 : i64} {
  func.func @_proj_log_softmax_kernel(%arg0: i32, %arg1: i32, %arg2: i32, %arg3: memref<16x32xbf16, #tpu.memory_space<vmem>>, %arg4: memref<32x256xbf16, #tpu.memory_space<vmem>>, %arg5: memref<1x256xf32, #tpu.memory_space<vmem>>, %arg6: memref<16x256xf32, #tpu.memory_space<vmem>>, %arg7: memref<16x1xf32, #tpu.memory_space<vmem>>, %arg8: memref<16x1xf32, #tpu.memory_space<vmem>>) attributes {dimension_semantics = [#tpu.dimension_semantics<parallel>, #tpu.dimension_semantics<arbitrary>, #tpu.dimension_semantics<arbitrary>], iteration_bounds = array<i64: 1, 2, 1>, scalar_prefetch = 0 : i64, scratch_operands = 2 : i64, tpu.core_type = #tpu.core_type<tc>, window_params = [{transform_indices = @transform_0, window_bounds = array<i64: 16, 32>}, {transform_indices = @transform_1, window_bounds = array<i64: 32, 256>}, {transform_indices = @transform_2, window_bounds = array<i64: 1, 256>}, {transform_indices = @transform_3, window_bounds = array<i64: 16, 256>}]} {
    %c0 = arith.constant 0 : index
    %c0_0 = arith.constant 0 : index
    %0 = vector.load %arg3[%c0, %c0_0] : memref<16x32xbf16, #tpu.memory_space<vmem>>, vector<16x32xbf16>
    %c0_1 = arith.constant 0 : index
    %c0_2 = arith.constant 0 : index
    %1 = vector.load %arg4[%c0_1, %c0_2] : memref<32x256xbf16, #tpu.memory_space<vmem>>, vector<32x256xbf16>
    %cst = arith.constant dense<0.000000e+00> : vector<16x256xf32>
    %2 = tpu.matmul %0, %1, %cst {dimension_numbers = #tpu.dot_dimension_numbers<[1], [0], [0], [1], [0, 0, 1, 1], [], []>} : vector<16x32xbf16>, vector<32x256xbf16>, vector<16x256xf32> -> vector<16x256xf32>
    %c0_3 = arith.constant 0 : index
    %c0_4 = arith.constant 0 : index
    %3 = vector.load %arg5[%c0_3, %c0_4] : memref<1x256xf32, #tpu.memory_space<vmem>>, vector<1x256xf32>
    %4 = vector.broadcast %3 : vector<1x256xf32> to vector<16x256xf32>
    %5 = arith.addf %2, %4 : vector<16x256xf32>
    %c0_i32 = arith.constant 0 : i32
    %6 = arith.cmpi eq, %arg1, %c0_i32 : i32
    %c0_i32_5 = arith.constant 0 : i32
    %7 = arith.cmpi eq, %arg2, %c0_i32_5 : i32
    %8 = arith.andi %6, %7 : i1
    %9 = arith.extui %8 : i1 to i32
    %c0_i32_6 = arith.constant 0 : i32
    %10 = arith.cmpi ne, %9, %c0_i32_6 : i32
    scf.if %10 {
      %cst_10 = arith.constant 0xFF800000 : f32
      %17 = vector.broadcast %cst_10 : f32 to vector<16x1xf32>
      %c0_11 = arith.constant 0 : index
      %c0_12 = arith.constant 0 : index
      %18 = vector.load %arg7[%c0_11, %c0_12] : memref<16x1xf32, #tpu.memory_space<vmem>>, vector<16x1xf32>
      tpu.vector_store %arg7[%c0_11, %c0_12], %17 {strides = array<i32>} : memref<16x1xf32, #tpu.memory_space<vmem>>, vector<16x1xf32>,
      %cst_13 = arith.constant 0.000000e+00 : f32
      %19 = vector.broadcast %cst_13 : f32 to vector<16x1xf32>
      %c0_14 = arith.constant 0 : index
      %c0_15 = arith.constant 0 : index
      %20 = vector.load %arg8[%c0_14, %c0_15] : memref<16x1xf32, #tpu.memory_space<vmem>>, vector<16x1xf32>
      tpu.vector_store %arg8[%c0_14, %c0_15], %19 {strides = array<i32>} : memref<16x1xf32, #tpu.memory_space<vmem>>, vector<16x1xf32>,
    } else {
    }
    %c0_i32_7 = arith.constant 0 : i32
    %11 = arith.cmpi eq, %arg1, %c0_i32_7 : i32
    %12 = arith.extui %11 : i1 to i32
    %c0_i32_8 = arith.constant 0 : i32
    %13 = arith.cmpi ne, %12, %c0_i32_8 : i32
    scf.if %13 {
      %c0_10 = arith.constant 0 : index
      %c0_11 = arith.constant 0 : index
      %17 = vector.load %arg7[%c0_10, %c0_11] : memref<16x1xf32, #tpu.memory_space<vmem>>, vector<16x1xf32>
      %cst_12 = arith.constant dense<0xFF800000> : vector<16xf32>
      %18 = vector.multi_reduction <maximumf>, %5, %cst_12 [1] : vector<16x256xf32> to vector<16xf32>
      %19 = vector.shape_cast %18 : vector<16xf32> to vector<16x1xf32>
      %20 = arith.maximumf %17, %19 : vector<16x1xf32>
      %c0_13 = arith.constant 0 : index
      %c0_14 = arith.constant 0 : index
      %21 = vector.load %arg8[%c0_13, %c0_14] : memref<16x1xf32, #tpu.memory_space<vmem>>, vector<16x1xf32>
      %22 = arith.subf %17, %20 : vector<16x1xf32>
      %23 = math.exp %22 : vector<16x1xf32>
      %24 = arith.mulf %21, %23 : vector<16x1xf32>
      %25 = vector.broadcast %20 : vector<16x1xf32> to vector<16x256xf32>
      %26 = arith.subf %5, %25 : vector<16x256xf32>
      %27 = math.exp %26 : vector<16x256xf32>
      %cst_15 = arith.constant dense<0.000000e+00> : vector<16xf32>
      %28 = vector.multi_reduction <add>, %27, %cst_15 [1] : vector<16x256xf32> to vector<16xf32>
      %29 = vector.shape_cast %28 : vector<16xf32> to vector<16x1xf32>
      %30 = arith.addf %24, %29 : vector<16x1xf32>
      %c0_16 = arith.constant 0 : index
      %c0_17 = arith.constant 0 : index
      %31 = vector.load %arg8[%c0_16, %c0_17] : memref<16x1xf32, #tpu.memory_space<vmem>>, vector<16x1xf32>
      tpu.vector_store %arg8[%c0_16, %c0_17], %30 {strides = array<i32>} : memref<16x1xf32, #tpu.memory_space<vmem>>, vector<16x1xf32>,
      %c0_18 = arith.constant 0 : index
      %c0_19 = arith.constant 0 : index
      %32 = vector.load %arg7[%c0_18, %c0_19] : memref<16x1xf32, #tpu.memory_space<vmem>>, vector<16x1xf32>
      tpu.vector_store %arg7[%c0_18, %c0_19], %20 {strides = array<i32>} : memref<16x1xf32, #tpu.memory_space<vmem>>, vector<16x1xf32>,
    } else {
    }
    %c1_i32 = arith.constant 1 : i32
    %14 = arith.cmpi eq, %arg1, %c1_i32 : i32
    %15 = arith.extui %14 : i1 to i32
    %c0_i32_9 = arith.constant 0 : i32
    %16 = arith.cmpi ne, %15, %c0_i32_9 : i32
    scf.if %16 {
      %c0_10 = arith.constant 0 : index
      %c0_11 = arith.constant 0 : index
      %17 = vector.load %arg7[%c0_10, %c0_11] : memref<16x1xf32, #tpu.memory_space<vmem>>, vector<16x1xf32>
      %c0_12 = arith.constant 0 : index
      %c0_13 = arith.constant 0 : index
      %18 = vector.load %arg8[%c0_12, %c0_13] : memref<16x1xf32, #tpu.memory_space<vmem>>, vector<16x1xf32>
      %19 = math.log %18 : vector<16x1xf32>
      %20 = arith.addf %17, %19 : vector<16x1xf32>
      %21 = vector.broadcast %20 : vector<16x1xf32> to vector<16x256xf32>
      %22 = arith.subf %5, %21 : vector<16x256xf32>
      %c0_14 = arith.constant 0 : index
      %c0_15 = arith.constant 0 : index
      %23 = vector.load %arg6[%c0_14, %c0_15] : memref<16x256xf32, #tpu.memory_space<vmem>>, vector<16x256xf32>
      tpu.vector_store %arg6[%c0_14, %c0_15], %22 {strides = array<i32>} : memref<16x256xf32, #tpu.memory_space<vmem>>, vector<16x256xf32>,
    } else {
    }
    return
  }
  func.func @transform_0(%arg0: i32, %arg1: i32, %arg2: i32) -> (i32, i32) {
    %c0_i32 = arith.constant 0 : i32
    %c0_i32_0 = arith.constant 0 : i32
    return %arg0, %c0_i32 : i32, i32
  }
  func.func @transform_1(%arg0: i32, %arg1: i32, %arg2: i32) -> (i32, i32) {
    %c0_i32 = arith.constant 0 : i32
    %c0_i32_0 = arith.constant 0 : i32
    return %c0_i32, %arg2 : i32, i32
  }
  func.func @transform_2(%arg0: i32, %arg1: i32, %arg2: i32) -> (i32, i32) {
    %c0_i32 = arith.constant 0 : i32
    %c0_i32_0 = arith.constant 0 : i32
    return %c0_i32, %arg2 : i32, i32
  }
  func.func @transform_3(%arg0: i32, %arg1: i32, %arg2: i32) -> (i32, i32) {
    %c0_i32 = arith.constant 0 : i32
    return %arg0, %arg2 : i32, i32
  }
}

</mosaic_0001>

<llo_original>
// kernel: proj_log_softmax.1
$region0: #{proj_log_softmax.1}
  #allocation0 [shape = 'u32[]', space=smem, size = 0x4, offset = 0x4, fixed_abs, tag = 'smem constant byte address 0x4 - core index']
  #allocation1 [shape = 'u32[144,128]{1,0:T(1,128)}', space=vmem, size = 0x12000, scoped, tag = 'internal scratch']
  #allocation2 [shape = 'f32[16,1]{1,0:T(8,128)}', space=vmem, size = 0x2000, scoped, tag = 'scratch operand']
  #allocation3 [shape = 'f32[16,1]{1,0:T(8,128)}', space=vmem, size = 0x2000, scoped, tag = 'scratch operand']
  %s0 = inlined_call_operand.vmem [shape: bf16[16,32], index: 0, kind: input, shape index: {}]
  %s1 = inlined_call_operand.hbm [shape: bf16[32,256], index: 1, kind: input, shape index: {}]
  %s2 = inlined_call_operand.vmem [shape: f32[1,256], index: 2, kind: input, shape index: {}]
  %s3 = inlined_call_operand.hbm [shape: f32[16,256], index: 3, kind: output, shape index: {}]
  %s4 = sld [smem:[#allocation0]]
  $region61: #{proj_log_softmax.1} parent=0
    _
  %s6 = ssub.s32 1, %s4
  %s7 = scalar_select 0, %s6, %s4
  $region1: #{proj_log_softmax.1} parent=0
    #allocation4 [shape = 'u8[16384]{0}', space=vmem, size = 0x4000, scoped, tag = 'input window, operand 1, single buffered']
    #allocation5 [shape = 's32[2]{0}', space=sflag, size = 0x8, scoped, tag = 'scoped memory for proj_log_softmax.1']
    #allocation6 [shape = 's32[2]{0}', space=sflag, size = 0x8, scoped, tag = 'scoped memory for proj_log_softmax.1']
    #allocation7 [shape = 'u8[16384]{0}', space=vmem, size = 0x4000, scoped, tag = 'output window, operand 0, single buffered']
    %8 = vsyncpa [#allocation5], 0
    %9 = vsyncpa [#allocation6], 0
    loop: start=0, step=1, limit=4
    $region2: #{proj_log_softmax.1} parent=1 // loop_pre_header
      _
    $region3: #{proj_log_softmax.1} parent=1 // loop_header
      %s11 = sphi 0, %s15
      %p12 = scmp.ge.s32.totalorder %s11, 4
      %s18 = sphi 0, %s37
      %s19 = sphi 0, %s33
      %s20 = sphi 0, %s29
      %s21 = sphi 0, %s18
      %s22 = sphi 0, %s19
      %s23 = sphi 0, %s20
      %s24 = sphi 0, %s21
      %s25 = sphi 0, %s22
      %s26 = sphi 0, %s23
      %s40 = sphi 0, %s42
      %s43 = sphi 0, %s40
      %s44 = sphi 0, %s43
      %s60 = sphi 0, %s44
      %s66 = sphi 0, %s68
      %s69 = sphi 0, %s66
      %s70 = sphi 0, %s69
      %s86 = sphi 0, %s70
      %s92 = sphi 0, %s94
      %s95 = sphi 0, %s92
      %s96 = sphi 0, %s95
      %s112 = sphi 0, %s96
      %s120 = sphi 0, %s122
      %s123 = sphi 0, %s120
      %s124 = sphi 0, %s123
      %s140 = sphi 0, %s124
    $region4: #{proj_log_softmax.1} parent=1 // loop_header_branch
      %14 = sbr.rel (%p12) target = $region8
    $region5: #{proj_log_softmax.1} parent=1 // loop_body
      %s16 = ssub.s32 %s11, 1
      %s17 = ssub.s32 %s11, 2
      %s27 = sadd.s32 1, %s20
      %p28 = scmp.ge.s32.totalorder %s27, 1
      %s29 = scalar_select %p28, 0, %s27
      %s30 = sadd.s32 1, %s19
      %s31 = scalar_select %p28, %s30, %s19
      %p32 = scmp.ge.s32.totalorder %s31, 2
      %s33 = scalar_select %p32, 0, %s31
      %s34 = sadd.s32 1, %s18
      %s35 = scalar_select %p32, %s34, %s18
      %p36 = scmp.ge.s32.totalorder %s35, 1
      %s37 = scalar_select %p36, 0, %s35
      %s38 = ssub.s32 %s18, %s37
      %p39 = scmp.eq.s32.totalorder %s38, 0
      %s41 = sadd.s32 %s40, 1
      %s42 = scalar_select %p39, %s40, %s41
      %p45 = pneg %p39
      %p46 = scmp.eq.s32.totalorder %s11, 1
      %p47 = por %p45, %p46
      %p48 = scmp.ne.s32.totalorder %s40, %s43
      %p49 = scmp.eq.s32.totalorder %s11, 0
      %p50 = por %p48, %p49
      %p51 = scmp.ne.s32.totalorder %s40, %s43
      %p52 = scmp.eq.s32.totalorder %s16, 1
      %p53 = por %p51, %p52
      %p54 = scmp.ne.s32.totalorder %s43, %s44
      %p55 = scmp.eq.s32.totalorder %s16, 0
      %p56 = por %p54, %p55
      %p57 = scmp.ne.s32.totalorder %s43, %s44
      %p58 = scmp.eq.s32.totalorder %s17, 1
      %p59 = por %p57, %p58
      %p61 = scmp.ne.s32.totalorder %s44, %s60
      %p62 = scmp.eq.s32.totalorder %s17, 0
      %p63 = por %p61, %p62
      %s64 = ssub.s32 %s20, %s29
      %p65 = scmp.eq.s32.totalorder %s64, 0
      %s67 = sadd.s32 %s66, 1
      %s68 = scalar_select %p65, %s66, %s67
      %p71 = pneg %p65
      %p72 = scmp.eq.s32.totalorder %s11, 1
      %p73 = por %p71, %p72
      %p74 = scmp.ne.s32.totalorder %s66, %s69
      %p75 = scmp.eq.s32.totalorder %s11, 0
      %p76 = por %p74, %p75
      %p77 = scmp.ne.s32.totalorder %s66, %s69
      %p78 = scmp.eq.s32.totalorder %s16, 1
      %p79 = por %p77, %p78
      %p80 = scmp.ne.s32.totalorder %s69, %s70
      %p81 = scmp.eq.s32.totalorder %s16, 0
      %p82 = por %p80, %p81
      %p83 = scmp.ne.s32.totalorder %s69, %s70
      %p84 = scmp.eq.s32.totalorder %s17, 1
      %p85 = por %p83, %p84
      %p87 = scmp.ne.s32.totalorder %s70, %s86
      %p88 = scmp.eq.s32.totalorder %s17, 0
      %p89 = por %p87, %p88
      %s90 = ssub.s32 %s20, %s29
      %p91 = scmp.eq.s32.totalorder %s90, 0
      %s93 = sadd.s32 %s92, 1
      %s94 = scalar_select %p91, %s92, %s93
      %p97 = pneg %p91
      %p98 = scmp.eq.s32.totalorder %s11, 1
      %p99 = por %p97, %p98
      %p100 = scmp.ne.s32.totalorder %s92, %s95
      %p101 = scmp.eq.s32.totalorder %s11, 0
      %p102 = por %p100, %p101
      %p103 = scmp.ne.s32.totalorder %s92, %s95
      %p104 = scmp.eq.s32.totalorder %s16, 1
      %p105 = por %p103, %p104
      %p106 = scmp.ne.s32.totalorder %s95, %s96
      %p107 = scmp.eq.s32.totalorder %s16, 0
      %p108 = por %p106, %p107
      %p109 = scmp.ne.s32.totalorder %s95, %s96
      %p110 = scmp.eq.s32.totalorder %s17, 1
      %p111 = por %p109, %p110
      %p113 = scmp.ne.s32.totalorder %s96, %s112
      %p114 = scmp.eq.s32.totalorder %s17, 0
      %p115 = por %p113, %p114
      %s116 = ssub.s32 %s18, %s37
      %s117 = ssub.s32 %s20, %s29
      %s118 = sor.u32 %s116, %s117
      %p119 = scmp.eq.s32.totalorder %s118, 0
      %s121 = sadd.s32 %s120, 1
      %s122 = scalar_select %p119, %s120, %s121
      %p125 = pneg %p119
      %p126 = scmp.eq.s32.totalorder %s11, 1
      %p127 = por %p125, %p126
      %p128 = scmp.ne.s32.totalorder %s120, %s123
      %p129 = scmp.eq.s32.totalorder %s11, 0
      %p130 = por %p128, %p129
      %p131 = scmp.ne.s32.totalorder %s120, %s123
      %p132 = scmp.eq.s32.totalorder %s16, 1
      %p133 = por %p131, %p132
      %p134 = scmp.ne.s32.totalorder %s123, %s124
      %p135 = scmp.eq.s32.totalorder %s16, 0
      %p136 = por %p134, %p135
      %p137 = scmp.ne.s32.totalorder %s123, %s124
      %p138 = scmp.eq.s32.totalorder %s17, 1
      %p139 = por %p137, %p138
      %p141 = scmp.ne.s32.totalorder %s124, %s140
      %p142 = scmp.eq.s32.totalorder %s17, 0
      %p143 = por %p141, %p142
      %p144 = scmp.le.s32.totalorder 1, %s11
      %p145 = scmp.lt.s32.totalorder %s11, 3
      %p146 = pnand %p144, %p145
      %p147 = pneg %p146
      // Predicated region
      $region9: #{proj_log_softmax.1} parent=5 // pred_check
        _
      $region10: #{proj_log_softmax.1} parent=5 // pred_check_branch
        %149 = sbr.rel (%p146) target = $region12
      $region11: #{proj_log_softmax.1} parent=5 // pred_region
        %s150 = ssub.s32 %s11, 1
        // Predicated region
        $region13: #{proj_log_softmax.1} parent=11 // pred_check
          %p151 = pneg %p56
        $region14: #{proj_log_softmax.1} parent=11 // pred_check_branch
          %153 = sbr.rel (%p151) target = $region16
        $region15: #{proj_log_softmax.1} parent=11 // pred_region
          %s154 = smul.u32 2, %s21
          %p155 = scmp.lt.s32.totalorder %s154, 1
          %s156 = scalar_select %p155, %s154, 1
          %s157 = smul.addr %s156, 4
          %s158 = scalar_lea.vmem %s0, %s157
          %s159 = smul.u32 2, %s21
        $region16: #{proj_log_softmax.1} parent=11 // pred_fallthru
          _
        // Predicated region
        $region17: #{proj_log_softmax.1} parent=11 // pred_check
          %p160 = pneg %p82
        $region18: #{proj_log_softmax.1} parent=11 // pred_check_branch
          %162 = sbr.rel (%p160) target = $region20
        $region19: #{proj_log_softmax.1} parent=11 // pred_region
          %s163 = smul.u32 2, %s23
          %s165 = ssub.s32 512, 512
          %166 = vsyncadd [#allocation5], %s165
          %s167 = smul.addr %s163, 64
          %s168 = scalar_lea.hbm %s1, %s167
          %s169 = sshll.u32 [#allocation4], 4
          %s170 = int_to_ptr.vmem [resolvable:$true] %s169
          %175 = dma.hbm_to_vmem [thread:$0]  %s168, 512, %s170, [#allocation5], 128, 128, 8
        $region20: #{proj_log_softmax.1} parent=11 // pred_fallthru
          _
        // Predicated region
        $region21: #{proj_log_softmax.1} parent=11 // pred_check
          %p176 = pneg %p108
        $region22: #{proj_log_softmax.1} parent=11 // pred_check_branch
          %178 = sbr.rel (%p176) target = $region24
        $region23: #{proj_log_softmax.1} parent=11 // pred_region
          %s179 = smul.u32 2, %s23
          %p180 = scmp.lt.s32.totalorder %s179, 1
          %s181 = scalar_select %p180, %s179, 1
          %s182 = scalar_lea.vmem %s2, %s181
          %s183 = smul.u32 2, %s23
        $region24: #{proj_log_softmax.1} parent=11 // pred_fallthru
          _
      $region12: #{proj_log_softmax.1} parent=5 // pred_fallthru
        _
      %p184 = scmp.lt.s32.totalorder %s11, 2
      // Predicated region
      $region25: #{proj_log_softmax.1} parent=5 // pred_check
        %p185 = pneg %p184
      $region26: #{proj_log_softmax.1} parent=5 // pred_check_branch
        %187 = sbr.rel (%p185) target = $region28
      $region27: #{proj_log_softmax.1} parent=5 // pred_region
        _
      $region28: #{proj_log_softmax.1} parent=5 // pred_fallthru
        _
      %p188 = scmp.le.s32.totalorder 1, %s11
      %p189 = scmp.lt.s32.totalorder %s11, 3
      %p190 = pnand %p188, %p189
      %p191 = pneg %p190
      // Predicated region
      $region29: #{proj_log_softmax.1} parent=5 // pred_check
        _
      $region30: #{proj_log_softmax.1} parent=5 // pred_check_branch
        %193 = sbr.rel (%p190) target = $region32
      $region31: #{proj_log_softmax.1} parent=5 // pred_region
        %s194 = ssub.s32 %s11, 1
        // Predicated region
        $region33: #{proj_log_softmax.1} parent=31 // pred_check
          %p195 = pneg %p82
        $region34: #{proj_log_softmax.1} parent=31 // pred_check_branch
          %197 = sbr.rel (%p195) target = $region36
        $region35: #{proj_log_softmax.1} parent=31 // pred_region
          %198 = dma.done [#allocation5], 512
        $region36: #{proj_log_softmax.1} parent=31 // pred_fallthru
          _
        %s199 = smul.u32 2, %s21
        %p200 = scmp.lt.s32.totalorder %s199, 1
        %s201 = scalar_select %p200, %s199, 1
        %s202 = smul.addr %s201, 4
        %s203 = scalar_lea.vmem %s0, %s202
        %p204 = pneg %p56
        %p205 = pneg %p53
        %p206 = pneg %p82
        %p207 = pneg %p79
        %s208 = smul.u32 2, %s23
        %p209 = scmp.lt.s32.totalorder %s208, 1
        %s210 = scalar_select %p209, %s208, 1
        %s211 = scalar_lea.vmem %s2, %s210
        %p212 = pneg %p108
        %p213 = pneg %p105
        %p214 = pneg %p136
        %p215 = pneg %p133
        %s216 = smul.u32 2, %s21
        %p217 = scmp.lt.s32.totalorder %s216, 1
        %s218 = scalar_select %p217, %s216, 1
        %s219 = smul.addr %s218, 4
        %s220 = scalar_lea.vmem %s0, %s219
        %s221 = smul.u32 2, %s21
        %s222 = smul.u32 2, %s23
        %s223 = smul.u32 2, %s23
        %p224 = scmp.lt.s32.totalorder %s223, 1
        %s225 = scalar_select %p224, %s223, 1
        %s226 = scalar_lea.vmem %s2, %s225
        %s227 = smul.u32 2, %s23
        %s228 = smul.u32 2, %s21
        %s229 = smul.u32 2, %s23
        %v231 = vld [vmem:[%s220] sm:$0xf]
        %v232 = vld [vmem:[%s220 + $0x4] sm:$0xf]
        %v233 = vld [vmem:[#allocation4] sm:$0xff]
        %v234 = vld [vmem:[#allocation4 + $0x8] sm:$0xff]
        %v235 = vld [vmem:[#allocation4 + $0x10] sm:$0xff]
        %v236 = vld [vmem:[#allocation4 + $0x18] sm:$0xff]
        %v237 = vld [vmem:[%s226] sm:$0x3]
        %v239 = vlaneseq
        %v240 = vshrl.u32 %v239, 7
        %v241 = vsub.s32 0, %v240
        %v242 = vrot.slane %v237, %v241
        %v243 = vlaneseq
        %v244 = vshrl.u32 %v243, 7
        %v245 = vsub.s32 1, %v244
        %v246 = vrot.slane %v237, %v245
        %v251 = vunpack.c.l.b16 %v231
        %v252 = vunpack.c.l.b16 %v232
        %v253 = vpack.c.b16 %v252, %v251
        %v258 = vunpack.c.l.b16 %v233
        %v259 = vunpack.c.h.b16 %v233
        %v260 = vunpack.c.l.b16 %v234
        %v261 = vunpack.c.h.b16 %v234
        %v262 = vunpack.c.l.b16 %v235
        %v263 = vunpack.c.h.b16 %v235
        %v264 = vunpack.c.l.b16 %v236
        %v265 = vunpack.c.h.b16 %v236
        %v266 = vpack.c.b16 %v260, %v258
        %v267 = vpack.c.b16 %v261, %v259
        %v268 = vpack.c.b16 %v264, %v262
        %v269 = vpack.c.b16 %v265, %v263
        %vm274 = vcmask 261120
        %v276 = vsel %vm274, %v253, 0
        %278 = vmatprep.subr.bf16.mxu0 0
        %279 = vmatpush1.bf16.msra.mxu0 0
        %280 = vmatprep.subr.bf16.mxu0 0
        %281 = vmatpush1.bf16.msra.mxu0 0
        %282 = vmatprep.subr.bf16.mxu0 0
        %283 = vmatpush1.bf16.msra.mxu0 0
        %284 = vmatprep.subr.bf16.mxu0 0
        %285 = vmatpush1.bf16.msra.mxu0 0
        %286 = vmatprep.subr.bf16.mxu0 0
        %287 = vmatpush1.bf16.msra.mxu0 0
        %288 = vmatprep.subr.bf16.mxu0 0
        %289 = vmatpush1.bf16.msra.mxu0 0
        %290 = vmatprep.subr.bf16.mxu0 %v269
        %291 = vmatpush1.bf16.msra.mxu0 %v268
        %292 = vmatprep.subr.bf16.mxu0 %v267
        %293 = vmatpush1.bf16.msra.mxu0 %v266
        %294 = vmatprep.subr.bf16.mxu0 0
        %295 = vmatpush2.bf16.msra.mxu0 0
        %296 = vmatprep.subr.bf16.mxu0 0
        %297 = vmatpush2.bf16.msra.mxu0 0
        %298 = vmatprep.subr.bf16.mxu0 0
        %299 = vmatpush2.bf16.msra.mxu0 0
        %300 = vmatprep.subr.bf16.mxu0 0
        %301 = vmatpush2.bf16.msra.mxu0 0
        %302 = vmatprep.subr.bf16.mxu0 0
        %303 = vmatpush2.bf16.msra.mxu0 0
        %304 = vmatprep.subr.bf16.mxu0 0
        %305 = vmatpush2.bf16.msra.mxu0 0
        %306 = vmatprep.subr.bf16.mxu0 0
        %307 = vmatpush2.bf16.msra.mxu0 0
        %308 = vmatprep.subr.bf16.mxu0 0
        %309 = vmatpush2.bf16.msra.mxu0 0
        %310 = vmatprep.mubr.bf16.mxu0 0
        %311 = vmatmul.mubr.bf16.gmra.mxu0 %v276
        %v312 = vpop.f32.mrf.mxu0
        %v313 = vadd.f32 %v242, %v312
        %v314 = vpop.f32.mrf.mxu0
        %v315 = vadd.f32 %v246, %v314
        %v316 = vpop.f32.mrf.mxu0
        %v317 = vadd.f32 %v242, %v316
        %v318 = vpop.f32.mrf.mxu0
        %v319 = vadd.f32 %v246, %v318
        %320 = vdwg.mxu0
        %p321 = scmp.eq.s32.totalorder %s22, 0
        %p322 = scmp.eq.s32.totalorder %s23, 0
        %p323 = pnand %p321, %p322
        %p324 = pneg %p323
        // Predicated region
        $region37: #{proj_log_softmax.1} parent=31 // pred_check
          _
        $region38: #{proj_log_softmax.1} parent=31 // pred_check_branch
          %326 = sbr.rel (%p323) target = $region40
        $region39: #{proj_log_softmax.1} parent=31 // pred_region
          %vm327 = vcmask 7168
          %328 = vst.msk [vmem:[#allocation2] sm:$0xff] %vm327, -inf
          %329 = vst.msk [vmem:[#allocation2 + $0x8] sm:$0xff] %vm327, -inf
          %330 = vst.msk [vmem:[#allocation3] sm:$0xff] %vm327, 0.0
          %331 = vst.msk [vmem:[#allocation3 + $0x8] sm:$0xff] %vm327, 0.0
        $region40: #{proj_log_softmax.1} parent=31 // pred_fallthru
          _
        // Predicated region
        $region41: #{proj_log_softmax.1} parent=31 // pred_check
          %p332 = pneg %p321
        $region42: #{proj_log_softmax.1} parent=31 // pred_check_branch
          %334 = sbr.rel (%p332) target = $region44
        $region43: #{proj_log_softmax.1} parent=31 // pred_region
          %v335 = vld [vmem:[#allocation2] sm:$0xff]
          %v336 = vld [vmem:[#allocation2 + $0x8] sm:$0xff]
          %v337 = vmax.f32 %v313, %v315
          %338 = vmax.xlane.f32.xlu0 %v337
          %v339 = vpop.xlane.xlu0 %338
          %v340 = vmax.f32 %v317, %v319
          %341 = vmax.xlane.f32.xlu0 %v340
          %v342 = vpop.xlane.xlu0 %341
          %v343 = vmax.f32 %v335, %v339
          %v344 = vmax.f32 %v336, %v342
          %v345 = vld [vmem:[#allocation3] sm:$0xff]
          %v346 = vld [vmem:[#allocation3 + $0x8] sm:$0xff]
          %v347 = vsub.f32 %v335, %v343
          %v348 = vsub.f32 %v336, %v344
          %v349 = vmul.f32 %v347, 1.442695
          %v350 = vpow.pop %v349
          %v351 = vmul.f32 %v348, 1.442695
          %v352 = vpow.pop %v351
          %v353 = vmul.f32 %v345, %v350
          %v354 = vmul.f32 %v346, %v352
          %356 = vset.pattern.permute.xlu0 0
          %357 = vperm.xlu0 %356, %v343
          %v358 = vpop.permute.xlu0 %357
          %361 = vset.pattern.permute.xlu0 0
          %362 = vperm.xlu0 %361, %v344
          %v363 = vpop.permute.xlu0 %362
          %v365 = vsub.f32 %v313, %v358
          %v366 = vsub.f32 %v315, %v358
          %v367 = vsub.f32 %v317, %v363
          %v368 = vsub.f32 %v319, %v363
          %v369 = vmul.f32 %v365, 1.442695
          %v370 = vpow.pop %v369
          %v371 = vmul.f32 %v366, 1.442695
          %v372 = vpow.pop %v371
          %v373 = vmul.f32 %v367, 1.442695
          %v374 = vpow.pop %v373
          %v375 = vmul.f32 %v368, 1.442695
          %v376 = vpow.pop %v375
          %v377 = vadd.f32 %v370, %v372
          %378 = vadd.xlane.f32.xlu0 %v377
          %v379 = vpop.xlane.xlu0 %378
          %v380 = vadd.f32 %v374, %v376
          %381 = vadd.xlane.f32.xlu0 %v380
          %v382 = vpop.xlane.xlu0 %381
          %v383 = vadd.f32 %v353, %v379
          %v384 = vadd.f32 %v354, %v382
          %vm385 = vcmask 7168
          %386 = vst.msk [vmem:[#allocation3] sm:$0xff] %vm385, %v383
          %387 = vst.msk [vmem:[#allocation3 + $0x8] sm:$0xff] %vm385, %v384
          %388 = vst.msk [vmem:[#allocation2] sm:$0xff] %vm385, %v343
          %389 = vst.msk [vmem:[#allocation2 + $0x8] sm:$0xff] %vm385, %v344
        $region44: #{proj_log_softmax.1} parent=31 // pred_fallthru
          _
        %p390 = scmp.eq.s32.totalorder %s22, 1
        // Predicated region
        $region45: #{proj_log_softmax.1} parent=31 // pred_check
          %p391 = pneg %p390
        $region46: #{proj_log_softmax.1} parent=31 // pred_check_branch
          %393 = sbr.rel (%p391) target = $region48
        $region47: #{proj_log_softmax.1} parent=31 // pred_region
          %v394 = vld [vmem:[#allocation2] sm:$0xff]
          %v395 = vld [vmem:[#allocation2 + $0x8] sm:$0xff]
          %v396 = vld [vmem:[#allocation3] sm:$0xff]
          %v397 = vld [vmem:[#allocation3 + $0x8] sm:$0xff]
          %v398 = vlog2.pop %v396
          %v399 = vmul.f32 %v398, 0.6931472
          %v400 = vlog2.pop %v397
          %v401 = vmul.f32 %v400, 0.6931472
          %v402 = vadd.f32 %v394, %v399
          %v403 = vadd.f32 %v395, %v401
          %405 = vset.pattern.permute.xlu0 0
          %406 = vperm.xlu0 %405, %v402
          %v407 = vpop.permute.xlu0 %406
          %410 = vset.pattern.permute.xlu0 0
          %411 = vperm.xlu0 %410, %v403
          %v412 = vpop.permute.xlu0 %411
          %v414 = vsub.f32 %v313, %v407
          %v415 = vsub.f32 %v315, %v407
          %v416 = vsub.f32 %v317, %v412
          %v417 = vsub.f32 %v319, %v412
          %418 = vst [vmem:[#allocation7] sm:$0xff] %v414
          %419 = vst [vmem:[#allocation7 + $0x8] sm:$0xff] %v415
          %420 = vst [vmem:[#allocation7 + $0x10] sm:$0xff] %v416
          %421 = vst [vmem:[#allocation7 + $0x18] sm:$0xff] %v417
        $region48: #{proj_log_softmax.1} parent=31 // pred_fallthru
          _
        // Predicated region
        $region49: #{proj_log_softmax.1} parent=31 // pred_check
          %p422 = pneg %p133
        $region50: #{proj_log_softmax.1} parent=31 // pred_check_branch
          %424 = sbr.rel (%p422) target = $region52
        $region51: #{proj_log_softmax.1} parent=31 // pred_region
          %s425 = smul.u32 2, %s21
          %s426 = smul.u32 2, %s23
          %s428 = ssub.s32 512, 512
          %429 = vsyncadd [#allocation6], %s428
          %s430 = smul.addr %s425, 2
          %s431 = sadd.s32 %s426, %s430
          %s432 = smul.addr %s431, 128
          %s433 = scalar_lea.hbm %s3, %s432
          %s434 = sshll.u32 [#allocation7], 4
          %s435 = int_to_ptr.vmem [resolvable:$true] %s434
          %440 = dma.vmem_to_hbm [thread:$0]  %s435, 512, %s433, [#allocation6], 256, 256, 16
        $region52: #{proj_log_softmax.1} parent=31 // pred_fallthru
          _
        // Predicated region
        $region53: #{proj_log_softmax.1} parent=31 // pred_check
          %p441 = pneg %p133
        $region54: #{proj_log_softmax.1} parent=31 // pred_check_branch
          %443 = sbr.rel (%p441) target = $region56
        $region55: #{proj_log_softmax.1} parent=31 // pred_region
          %444 = dma.done [#allocation6], 512
        $region56: #{proj_log_softmax.1} parent=31 // pred_fallthru
          _
      $region32: #{proj_log_softmax.1} parent=5 // pred_fallthru
        _
      %p445 = scmp.le.s32.totalorder 2, %s11
      // Predicated region
      $region57: #{proj_log_softmax.1} parent=5 // pred_check
        %p446 = pneg %p445
      $region58: #{proj_log_softmax.1} parent=5 // pred_check_branch
        %448 = sbr.rel (%p446) target = $region60
      $region59: #{proj_log_softmax.1} parent=5 // pred_region
        %s449 = ssub.s32 %s11, 2
      $region60: #{proj_log_softmax.1} parent=5 // pred_fallthru
        _
    $region6: #{proj_log_softmax.1} parent=1 // loop_footer
      %s15 = sadd.s32 1, %s11
    $region7: #{proj_log_softmax.1} parent=1 // loop_footer_branch
      %10 = sbr.rel target = $region3
    $region8: #{proj_log_softmax.1} parent=1 // loop_exit
      _
    %450 = vsyncpa [#allocation5], 1
    %s451 = scalar_lea.sflag [#allocation5], 1
    %452 = vsyncpa %s451, 1
    %453 = vsyncpa [#allocation6], 1
    %s454 = scalar_lea.sflag [#allocation6], 1
    %455 = vsyncpa %s454, 1

</llo_original>
